<compile_context>
chip_gen: v7x
topology: tpu7x:2x2x1
jax: 0.10.0
libtpu: 0.0.40
codegen_flags: <defaults>
</compile_context>

<pallas_src>
import jax
import jax.numpy as jnp
from jax.experimental import pallas as pl
from jax.experimental.pallas import tpu as pltpu

EPS = 1e-5
NEG_SLOPE = 0.2


def d1d_kernel(x_ref, w_ref, gb_ref, o_ref):
    # x_ref : (N, D)      full batch, full input dims (resident every step)
    # w_ref : (D, TF)     feature tile of the pre-transposed weight
    # gb_ref: (2, TF)     row 0 = gamma, row 1 = beta
    # o_ref : (N, TF)
    x = x_ref[...]
    w = w_ref[...]

    # Linear (bias omitted -- it cancels under training-mode BN mean subtraction).
    # MXU matmul with f32 accumulation; bf16 inputs go straight to the MXU.
    y = jnp.dot(x, w, preferred_element_type=jnp.float32)          # (N, TF) f32

    # BatchNorm1d, training mode: batch statistics, biased variance.
    mean = jnp.mean(y, axis=0, keepdims=True)                      # (1, TF)
    diff = y - mean                                                # (N, TF)
    var = jnp.mean(diff * diff, axis=0, keepdims=True)             # (1, TF)

    gamma = gb_ref[0:1, :].astype(jnp.float32)                     # (1, TF)
    beta = gb_ref[1:2, :].astype(jnp.float32)                      # (1, TF)
    scale = gamma * jax.lax.rsqrt(var + EPS)                       # (1, TF)
    z = diff * scale + beta                                        # (N, TF)

    # LeakyReLU(0.2)
    o_ref[...] = jnp.where(z >= 0, z, NEG_SLOPE * z).astype(o_ref.dtype)


def _choose_tile_f(f, n, d, vmem_budget_bytes=32 << 20):
    """Widest lane-dense feature tile that divides F and fits the VMEM budget,
    preferring >=2 grid steps (v7x has 2 TensorCores) when F is large."""
    if f <= 128:
        return f
    fitting = []
    for t in (512, 384, 256, 128):
        if f % t:
            continue
        # rough f32 estimate with default double-buffering of every operand
        need = 4 * (2 * n * d + 2 * d * t + 2 * n * t + 2 * 2 * t)
        if need <= vmem_budget_bytes:
            fitting.append(t)
    if not fitting:
        return 128 if f % 128 == 0 else f
    for t in fitting:
        if f // t >= 2:          # let the "parallel" axis shard across 2 TCs
            return t
    return fitting[0]


def prepare_params(weight, bias, gamma, beta):
    """One-time parameter layout prep (outside the hot path).

    weight: (F, D) as in nn.Linear  ->  stored pre-transposed as (D, F).
    bias is accepted for interface parity but unused: under training-mode
    BatchNorm the batch-mean subtraction cancels it exactly.
    gamma/beta are packed into a single (2, F) array (one DMA per step).
    """
    del bias
    wt = jnp.asarray(weight).T                          # (D, F)
    gb = jnp.stack([jnp.asarray(gamma), jnp.asarray(beta)], axis=0)   # (2, F)
    return wt, gb


def d1d_forward(x, wt, gb, *, tile_f=None):
    """x: (N, D); wt: (D, F) pre-transposed weight; gb: (2, F) [gamma; beta]."""
    n, d = x.shape
    f = wt.shape[1]
    if tile_f is None:
        tile_f = _choose_tile_f(f, n, d)
    assert f % tile_f == 0, "filters must be a multiple of tile_f"
    grid = (f // tile_f,)

    # Explicit VMEM budget (matters most on v7x: 64 MiB physical / 32 MiB scoped).
    est = 4 * (2 * n * d + 2 * d * tile_f + 2 * n * tile_f + 2 * 2 * tile_f)
    vmem_limit = int(min(max(est + (1 << 20), 16 << 20), 64 << 20))

    return pl.pallas_call(
        d1d_kernel,
        out_shape=jax.ShapeDtypeStruct((n, f), x.dtype),
        grid_spec=pltpu.PrefetchScalarGridSpec(
            num_scalar_prefetch=0,
            grid=grid,
            in_specs=[
                pl.BlockSpec((n, d), lambda j: (0, 0)),        # x: full, reused
                pl.BlockSpec((d, tile_f), lambda j: (0, j)),   # W^T feature tile
                pl.BlockSpec((2, tile_f), lambda j: (0, j)),   # packed gamma/beta
            ],
            out_specs=pl.BlockSpec((n, tile_f), lambda j: (0, j)),
        ),
        compiler_params=pltpu.CompilerParams(
            dimension_semantics=("parallel",),
            vmem_limit_bytes=vmem_limit),
    )(x, wt, gb)


if __name__ == "__main__":
    # Small shapes consistent with the module: batch=8, input_dims=32, filters=128
    N, INPUT_DIMS, FILTERS = 8, 32, 128

    key = jax.random.PRNGKey(0)
    kx, kw, kb = jax.random.split(key, 3)

    x = jax.random.normal(kx, (N, INPUT_DIMS), dtype=jnp.float32)

    # PyTorch-style init: uniform(-1/sqrt(D), 1/sqrt(D)) for Linear,
    # gamma=1 / beta=0 for BatchNorm1d.
    bound = 1.0 / (INPUT_DIMS ** 0.5)
    weight = jax.random.uniform(kw, (FILTERS, INPUT_DIMS), jnp.float32,
                                minval=-bound, maxval=bound)
    bias = jax.random.uniform(kb, (FILTERS,), jnp.float32,
                              minval=-bound, maxval=bound)
    gamma = jnp.ones((FILTERS,), jnp.float32)
    beta = jnp.zeros((FILTERS,), jnp.float32)

    wt, gb = prepare_params(weight, bias, gamma, beta)   # one-time layout prep
    out = d1d_forward(x, wt, gb)
    out = jax.block_until_ready(out)

    # Pure-JAX reference (includes the Linear bias; it cancels under BN, so the
    # kernel result must still match to fp tolerance).
    y_ref = x @ weight.T + bias
    m = y_ref.mean(axis=0, keepdims=True)
    v = ((y_ref - m) ** 2).mean(axis=0, keepdims=True)
    z_ref = (y_ref - m) / jnp.sqrt(v + EPS) * gamma + beta
    ref = jnp.where(z_ref >= 0, z_ref, NEG_SLOPE * z_ref)
    assert out.shape == ref.shape
    assert jnp.allclose(out, ref, atol=1e-4, rtol=1e-4), "mismatch vs reference"

    print("KERNEL_OK")
</pallas_src>

<mosaic_0001>
module attributes {stable_mosaic.version = 11 : i64} {
  func.func @d1d_kernel(%arg0: i32, %arg1: memref<8x32xf32, #tpu.memory_space<vmem>>, %arg2: memref<32x128xf32, #tpu.memory_space<vmem>>, %arg3: memref<2x128xf32, #tpu.memory_space<vmem>>, %arg4: memref<8x128xf32, #tpu.memory_space<vmem>>) attributes {dimension_semantics = [#tpu.dimension_semantics<parallel>], iteration_bounds = array<i64: 1>, scalar_prefetch = 0 : i64, scratch_operands = 0 : i64, tpu.core_type = #tpu.core_type<tc>, window_params = [{pipeline_mode = #tpu.pipeline_mode<synchronous>, transform_indices = @transform_0, window_bounds = array<i64: 8, 32>}, {transform_indices = @transform_1, window_bounds = array<i64: 32, 128>}, {transform_indices = @transform_2, window_bounds = array<i64: 2, 128>}, {transform_indices = @transform_3, window_bounds = array<i64: 8, 128>}]} {
    %c0 = arith.constant 0 : index
    %c0_0 = arith.constant 0 : index
    %0 = vector.load %arg1[%c0, %c0_0] : memref<8x32xf32, #tpu.memory_space<vmem>>, vector<8x32xf32>
    %c0_1 = arith.constant 0 : index
    %c0_2 = arith.constant 0 : index
    %1 = vector.load %arg2[%c0_1, %c0_2] : memref<32x128xf32, #tpu.memory_space<vmem>>, vector<32x128xf32>
    %cst = arith.constant dense<0.000000e+00> : vector<8x128xf32>
    %2 = tpu.matmul %0, %1, %cst {dimension_numbers = #tpu.dot_dimension_numbers<[1], [0], [0], [1], [0, 0, 1, 1], [], []>} : vector<8x32xf32>, vector<32x128xf32>, vector<8x128xf32> -> vector<8x128xf32>
    %cst_3 = arith.constant dense<0.000000e+00> : vector<128xf32>
    %3 = vector.multi_reduction <add>, %2, %cst_3 [0] : vector<8x128xf32> to vector<128xf32>
    %4 = vector.shape_cast %3 : vector<128xf32> to vector<1x128xf32>
    %cst_4 = arith.constant 8.000000e+00 : f32
    %5 = vector.broadcast %cst_4 : f32 to vector<1x128xf32>
    %6 = arith.divf %4, %5 : vector<1x128xf32>
    %7 = vector.broadcast %6 : vector<1x128xf32> to vector<8x128xf32>
    %8 = arith.subf %2, %7 : vector<8x128xf32>
    %9 = arith.mulf %8, %8 : vector<8x128xf32>
    %cst_5 = arith.constant dense<0.000000e+00> : vector<128xf32>
    %10 = vector.multi_reduction <add>, %9, %cst_5 [0] : vector<8x128xf32> to vector<128xf32>
    %11 = vector.shape_cast %10 : vector<128xf32> to vector<1x128xf32>
    %cst_6 = arith.constant 8.000000e+00 : f32
    %12 = vector.broadcast %cst_6 : f32 to vector<1x128xf32>
    %13 = arith.divf %11, %12 : vector<1x128xf32>
    %c0_7 = arith.constant 0 : index
    %c0_8 = arith.constant 0 : index
    %14 = vector.load %arg3[%c0_7, %c0_8] : memref<2x128xf32, #tpu.memory_space<vmem>>, vector<1x128xf32>
    %c1 = arith.constant 1 : index
    %c0_9 = arith.constant 0 : index
    %15 = vector.load %arg3[%c1, %c0_9] : memref<2x128xf32, #tpu.memory_space<vmem>>, vector<1x128xf32>
    %cst_10 = arith.constant 9.99999974E-6 : f32
    %16 = vector.broadcast %cst_10 : f32 to vector<1x128xf32>
    %17 = arith.addf %13, %16 : vector<1x128xf32>
    %18 = math.rsqrt %17 : vector<1x128xf32>
    %19 = arith.mulf %14, %18 : vector<1x128xf32>
    %20 = vector.broadcast %19 : vector<1x128xf32> to vector<8x128xf32>
    %21 = arith.mulf %8, %20 : vector<8x128xf32>
    %22 = vector.broadcast %15 : vector<1x128xf32> to vector<8x128xf32>
    %23 = arith.addf %21, %22 : vector<8x128xf32>
    %cst_11 = arith.constant 0.000000e+00 : f32
    %24 = vector.broadcast %cst_11 : f32 to vector<8x128xf32>
    %25 = arith.cmpf oge, %23, %24 : vector<8x128xf32>
    %cst_12 = arith.constant 2.000000e-01 : f32
    %26 = vector.broadcast %cst_12 : f32 to vector<8x128xf32>
    %27 = arith.mulf %26, %23 : vector<8x128xf32>
    %28 = arith.select %25, %23, %27 : vector<8x128xi1>, vector<8x128xf32>
    %c0_13 = arith.constant 0 : index
    %c0_14 = arith.constant 0 : index
    %29 = vector.load %arg4[%c0_13, %c0_14] : memref<8x128xf32, #tpu.memory_space<vmem>>, vector<8x128xf32>
    tpu.vector_store %arg4[%c0_13, %c0_14], %28 {strides = array<i32>} : memref<8x128xf32, #tpu.memory_space<vmem>>, vector<8x128xf32>,
    return
  }
  func.func @transform_0(%arg0: i32) -> (i32, i32) {
    %c0_i32 = arith.constant 0 : i32
    %c0_i32_0 = arith.constant 0 : i32
    %c0_i32_1 = arith.constant 0 : i32
    return %c0_i32, %c0_i32_0 : i32, i32
  }
  func.func @transform_1(%arg0: i32) -> (i32, i32) {
    %c0_i32 = arith.constant 0 : i32
    %c0_i32_0 = arith.constant 0 : i32
    return %c0_i32, %arg0 : i32, i32
  }
  func.func @transform_2(%arg0: i32) -> (i32, i32) {
    %c0_i32 = arith.constant 0 : i32
    %c0_i32_0 = arith.constant 0 : i32
    return %c0_i32, %arg0 : i32, i32
  }
  func.func @transform_3(%arg0: i32) -> (i32, i32) {
    %c0_i32 = arith.constant 0 : i32
    %c0_i32_0 = arith.constant 0 : i32
    return %c0_i32, %arg0 : i32, i32
  }
}

</mosaic_0001>

<llo_original>
// kernel: tpu_custom_call.1
$region0: #{tpu_custom_call.1}
  #allocation0 [shape = 'u32[]', space=smem, size = 0x4, offset = 0x4, fixed_abs, tag = 'smem constant byte address 0x4 - core index']
  #allocation1 [shape = 'u32[144,128]{1,0:T(1,128)}', space=vmem, size = 0x12000, scoped, tag = 'internal scratch']
  %s0 = inlined_call_operand.hbm [shape: f32[8,32], index: 0, kind: input, shape index: {}]
  %s1 = inlined_call_operand.hbm [shape: f32[32,128], index: 1, kind: input, shape index: {}]
  %s2 = inlined_call_operand.vmem [shape: f32[2,128], index: 2, kind: input, shape index: {}]
  %s3 = inlined_call_operand.hbm [shape: f32[8,128], index: 3, kind: output, shape index: {}]
  %s4 = sld [smem:[#allocation0]]
  $region30: #{tpu_custom_call.1} parent=0
    _
  %s6 = ssub.s32 1, %s4
  %s7 = scalar_select 0, %s6, %s4
  $region1: #{tpu_custom_call.1} parent=0
    #allocation2 [shape = 'u8[4096]{0}', space=vmem, size = 0x1000, scoped, tag = 'input window, operand 0, single buffered']
    #allocation3 [shape = 's32[1]{0}', space=sflag, size = 0x4, scoped, tag = 'scoped memory for tpu_custom_call.1']
    #allocation4 [shape = 's32[1]{0}', space=sflag, size = 0x4, scoped, tag = 'scoped memory for tpu_custom_call.1']
    #allocation5 [shape = 'u8[16384]{0}', space=vmem, size = 0x4000, scoped, tag = 'input window, operand 1, single buffered']
    #allocation6 [shape = 's32[1]{0}', space=sflag, size = 0x4, scoped, tag = 'scoped memory for tpu_custom_call.1']
    #allocation7 [shape = 'u8[4096]{0}', space=vmem, size = 0x1000, scoped, tag = 'output window, operand 0, single buffered']
    %8 = vsyncpa [#allocation3], 0
    %9 = vsyncpa [#allocation6], 0
    %10 = vsyncpa [#allocation4], 0
    // Predicated region
    $region2: #{tpu_custom_call.1} parent=1 // pred_check
      _
    $region3: #{tpu_custom_call.1} parent=1 // pred_check_branch
      %12 = sbr.rel (0) target = $region5
    $region4: #{tpu_custom_call.1} parent=1 // pred_region
      %s14 = ssub.s32 128, 128
      %15 = vsyncadd [#allocation3], %s14
      %s17 = sshll.u32 [#allocation2], 4
      %s18 = int_to_ptr.vmem [resolvable:$true] %s17
      %20 = dma.hbm_to_vmem [thread:$0]  %s0, 128, %s18, [#allocation3]
    $region5: #{tpu_custom_call.1} parent=1 // pred_fallthru
      _
    // Predicated region
    $region6: #{tpu_custom_call.1} parent=1 // pred_check
      _
    $region7: #{tpu_custom_call.1} parent=1 // pred_check_branch
      %22 = sbr.rel (0) target = $region9
    $region8: #{tpu_custom_call.1} parent=1 // pred_region
      %s24 = ssub.s32 512, 512
      %25 = vsyncadd [#allocation6], %s24
      %s26 = sshll.u32 [#allocation5], 4
      %s27 = int_to_ptr.vmem [resolvable:$true] %s26
      %32 = dma.hbm_to_vmem [thread:$0]  %s1, 512, %s27, [#allocation6], 128, 128, 8
    $region9: #{tpu_custom_call.1} parent=1 // pred_fallthru
      _
    // Predicated region
    $region10: #{tpu_custom_call.1} parent=1 // pred_check
      _
    $region11: #{tpu_custom_call.1} parent=1 // pred_check_branch
      %34 = sbr.rel (0) target = $region13
    $region12: #{tpu_custom_call.1} parent=1 // pred_region
      _
    $region13: #{tpu_custom_call.1} parent=1 // pred_fallthru
      _
    // Predicated region
    $region14: #{tpu_custom_call.1} parent=1 // pred_check
      _
    $region15: #{tpu_custom_call.1} parent=1 // pred_check_branch
      %36 = sbr.rel (0) target = $region17
    $region16: #{tpu_custom_call.1} parent=1 // pred_region
      %37 = dma.done [#allocation3], 128
    $region17: #{tpu_custom_call.1} parent=1 // pred_fallthru
      _
    // Predicated region
    $region18: #{tpu_custom_call.1} parent=1 // pred_check
      _
    $region19: #{tpu_custom_call.1} parent=1 // pred_check_branch
      %39 = sbr.rel (0) target = $region21
    $region20: #{tpu_custom_call.1} parent=1 // pred_region
      %40 = dma.done [#allocation6], 512
    $region21: #{tpu_custom_call.1} parent=1 // pred_fallthru
      _
    %v41 = vld [vmem:[#allocation2] sm:$0xff]
    %v42 = vld [vmem:[#allocation5] sm:$0xff]
    %v43 = vld [vmem:[#allocation5 + $0x8] sm:$0xff]
    %v44 = vld [vmem:[#allocation5 + $0x10] sm:$0xff]
    %v45 = vld [vmem:[#allocation5 + $0x18] sm:$0xff]
    %vm46 = vcmask 261120
    %v48 = vsel %vm46, %v41, 0
    %50 = vmatprep.subr.mxu0 0.0
    %51 = vmatpush1.msra.mxu0 %v42
    %52 = vmatprep.subr.mxu0 0.0
    %53 = vmatpush1.msra.mxu0 %v43
    %54 = vmatprep.subr.mxu0 0.0
    %55 = vmatpush1.msra.mxu0 %v44
    %56 = vmatprep.subr.mxu0 0.0
    %57 = vmatpush1.msra.mxu0 %v45
    %58 = vmatprep.subr.mxu0 0.0
    %59 = vmatpush1.msra.mxu0 0.0
    %60 = vmatprep.subr.mxu0 0.0
    %61 = vmatpush1.msra.mxu0 0.0
    %62 = vmatprep.subr.mxu0 0.0
    %63 = vmatpush1.msra.mxu0 0.0
    %64 = vmatprep.subr.mxu0 0.0
    %65 = vmatpush1.msra.mxu0 0.0
    %66 = vmatprep.subr.mxu0 0.0
    %67 = vmatpush1.msra.mxu0 0.0
    %68 = vmatprep.subr.mxu0 0.0
    %69 = vmatpush1.msra.mxu0 0.0
    %70 = vmatprep.subr.mxu0 0.0
    %71 = vmatpush1.msra.mxu0 0.0
    %72 = vmatprep.subr.mxu0 0.0
    %73 = vmatpush1.msra.mxu0 0.0
    %74 = vmatprep.subr.mxu0 0.0
    %75 = vmatpush1.msra.mxu0 0.0
    %76 = vmatprep.subr.mxu0 0.0
    %77 = vmatpush1.msra.mxu0 0.0
    %78 = vmatprep.subr.mxu0 0.0
    %79 = vmatpush1.msra.mxu0 0.0
    %80 = vmatprep.subr.mxu0 0.0
    %81 = vmatpush1.msra.mxu0 0.0
    %82 = vmatprep.subr.mxu0 0.0
    %83 = vmatpush1.msra.mxu0 0.0
    %84 = vmatprep.subr.mxu0 0.0
    %85 = vmatpush1.msra.mxu0 0.0
    %86 = vmatprep.subr.mxu0 0.0
    %87 = vmatpush1.msra.mxu0 0.0
    %88 = vmatprep.subr.mxu0 0.0
    %89 = vmatpush1.msra.mxu0 0.0
    %90 = vmatprep.subr.mxu0 0.0
    %91 = vmatpush1.msra.mxu0 0.0
    %92 = vmatprep.subr.mxu0 0.0
    %93 = vmatpush1.msra.mxu0 0.0
    %94 = vmatprep.subr.mxu0 0.0
    %95 = vmatpush1.msra.mxu0 0.0
    %96 = vmatprep.subr.mxu0 0.0
    %97 = vmatpush1.msra.mxu0 0.0
    %98 = vmatprep.subr.mxu0 0.0
    %99 = vmatpush1.msra.mxu0 0.0
    %100 = vmatprep.subr.mxu0 0.0
    %101 = vmatpush1.msra.mxu0 0.0
    %102 = vmatprep.subr.mxu0 0.0
    %103 = vmatpush1.msra.mxu0 0.0
    %104 = vmatprep.subr.mxu0 0.0
    %105 = vmatpush1.msra.mxu0 0.0
    %106 = vmatprep.subr.mxu0 0.0
    %107 = vmatpush1.msra.mxu0 0.0
    %108 = vmatprep.subr.mxu0 0.0
    %109 = vmatpush1.msra.mxu0 0.0
    %110 = vmatprep.subr.mxu0 0.0
    %111 = vmatpush1.msra.mxu0 0.0
    %112 = vmatprep.subr.mxu0 0.0
    %113 = vmatpush1.msra.mxu0 0.0
    %114 = vmatprep.mubr.f32.mxu0 0.0
    %115 = vmatmul.mubr.f32.gmra.mrb[0].mxu0 %v48
    %v116 = vpop.f32.mrb[0].mxu0
    %v117 = vadd.f32 0.0, %v116
    %v118 = vpop.f32.mrb[0].mxu0
    %119 = vdwg.mxu0
    %v120 = vrot.slane %v117, 4
    %v121 = vadd.f32 %v117, %v120
    %v122 = vrot.slane %v121, 2
    %v123 = vadd.f32 %v121, %v122
    %v124 = vrot.slane %v123, 1
    %v125 = vadd.f32 %v123, %v124
    %v126 = vrcp.pop 8.0
    %v127 = vmul.f32 %v125, %v126
    %v128 = vsub.f32 %v117, %v127
    %v129 = vmul.f32 %v128, %v128
    %v130 = vrot.slane %v129, 4
    %v131 = vadd.f32 %v129, %v130
    %v132 = vrot.slane %v131, 2
    %v133 = vadd.f32 %v131, %v132
    %v134 = vrot.slane %v133, 1
    %v135 = vadd.f32 %v133, %v134
    %v136 = vmul.f32 %v135, %v126
    %v137 = vld [vmem:[%s2] sm:$0x1]
    %v138 = vld [vmem:[%s2 + $0x1] sm:$0x1]
    %v139 = vadd.f32 %v136, 1e-05
    %v140 = vrsqrt.pop %v139
    %v141 = vmul.f32 %v137, %v140
    %v142 = vlaneseq
    %v143 = vshrl.u32 %v142, 7
    %v144 = vsub.s32 0, %v143
    %v145 = vrot.slane %v141, %v144
    %v146 = vmul.f32 %v128, %v145
    %v147 = vlaneseq
    %v148 = vshrl.u32 %v147, 7
    %v149 = vsub.s32 0, %v148
    %v150 = vrot.slane %v138, %v149
    %v151 = vadd.f32 %v146, %v150
    %vm152 = vcmp.ge.f32.partialorder %v151, 0.0
    %v153 = vmul.f32 %v151, 0.2
    %v154 = vsel %vm152, %v151, %v153
    %155 = vst [vmem:[#allocation7] sm:$0xff] %v154
    // Predicated region
    $region22: #{tpu_custom_call.1} parent=1 // pred_check
      _
    $region23: #{tpu_custom_call.1} parent=1 // pred_check_branch
      %157 = sbr.rel (0) target = $region25
    $region24: #{tpu_custom_call.1} parent=1 // pred_region
      %s159 = ssub.s32 128, 128
      %160 = vsyncadd [#allocation4], %s159
      %s162 = sshll.u32 [#allocation7], 4
      %s163 = int_to_ptr.vmem [resolvable:$true] %s162
      %165 = dma.vmem_to_hbm [thread:$0]  %s163, 128, %s3, [#allocation4]
    $region25: #{tpu_custom_call.1} parent=1 // pred_fallthru
      _
    // Predicated region
    $region26: #{tpu_custom_call.1} parent=1 // pred_check
      _
    $region27: #{tpu_custom_call.1} parent=1 // pred_check_branch
      %167 = sbr.rel (0) target = $region29
    $region28: #{tpu_custom_call.1} parent=1 // pred_region
      %168 = dma.done [#allocation4], 128
    $region29: #{tpu_custom_call.1} parent=1 // pred_fallthru
      _
    %169 = vsyncpa [#allocation3], 1
    %170 = vsyncpa [#allocation6], 1
    %171 = vsyncpa [#allocation4], 1

</llo_original>
